<compile_context>
chip_gen: v7x
topology: tpu7x:2x2x1
jax: 0.10.0
libtpu: 0.0.40
codegen_flags: <defaults>
</compile_context>

<pallas_src>
import jax
import jax.numpy as jnp
from jax.experimental import pallas as pl
from jax.experimental.pallas import tpu as pltpu

_TARGET_BLOCK_BYTES = 1 << 20  # ~1 MiB per input block (~85% HBM roofline)


def _cdiv(a, b):
    return -(-a // b)


def _round_up(x, m):
    return _cdiv(x, m) * m


def _choose_tile_rows(H, W, itemsize):
    """Rows per block: multiple of 8, ~1 MiB per input, never more than needed."""
    rows = _TARGET_BLOCK_BYTES // max(1, W * itemsize)
    rows = max(8, (rows // 8) * 8)
    rows = min(rows, _round_up(H, 8))
    return rows


def _make_kernel(tile_rows, H, W, need_mask):
    def kernel(iy_ref, gy_ref, ir_ref, mv_ref, out_ref):
        h = pl.program_id(1)

        @pl.when(h == 0)
        def _():
            out_ref[...] = jnp.zeros_like(out_ref)

        # Loads are in the arrays' native dtype; compute in f32.
        iy = iy_ref[...].astype(jnp.float32)   # image_vis, channel 0
        gy = gy_ref[...].astype(jnp.float32)   # generate_img, channel 0
        ir = ir_ref[...].astype(jnp.float32)   # image_ir, channel 0
        mv = mv_ref[...].astype(jnp.float32)   # mask_vi, channel 0

        # mask_ir * image_ir fused: where(mask_vi == 1, 0, image_ir)
        term = (jnp.abs(mv * iy - gy)
                + jnp.abs(gy - jnp.where(mv == 1.0, 0.0, ir)))

        if need_mask:
            # Last H-tile reads past the array edge (unspecified data); zero
            # out invalid rows so they contribute nothing to the sum.
            row = jax.lax.broadcasted_iota(jnp.int32, term.shape, 0)
            valid = H - h * tile_rows
            term = jnp.where(row < valid, term, 0.0)

        # Sublane-group fold: pure VPU adds, no cross-lane movement.
        out_ref[...] += jnp.sum(term.reshape(tile_rows // 8, 8, W), axis=0)

    return kernel


def mask_fusion_l1_loss(image_vis, image_ir, generate_img, mask_vi,
                        loss_weight=1.0):
    """MaskFusionL1loss.forward (reduction='mean')."""
    N, _, H, W = image_vis.shape
    # TODO(synk): if image_ir / mask_vi ever carry >1 channel with PyTorch
    # broadcasting semantics, extend the index_map over channels; standard
    # usage (single-channel ir / mask) is assumed here.
    K = N * H * W  # element count of each F.l1_loss mean

    itemsize = max(jnp.dtype(a.dtype).itemsize
                   for a in (image_vis, image_ir, generate_img, mask_vi))
    tile_rows = _choose_tile_rows(H, W, itemsize)
    num_h = _cdiv(H, tile_rows)
    need_mask = (num_h * tile_rows != H)

    # Block the original NCHW arrays directly; channel pinned to 0, batch and
    # channel dims squeezed so the kernel sees (tile_rows, W) tiles.
    in_spec = pl.BlockSpec(
        (pl.Squeezed(), pl.Squeezed(), tile_rows, W),
        lambda n, h: (n, 0, h, 0))
    out_spec = pl.BlockSpec(
        (pl.Squeezed(), 8, W),
        lambda n, h: (n, 0, 0))

    partials = pl.pallas_call(
        _make_kernel(tile_rows, H, W, need_mask),
        out_shape=jax.ShapeDtypeStruct((N, 8, W), jnp.float32),
        grid_spec=pltpu.PrefetchScalarGridSpec(
            num_scalar_prefetch=0,
            grid=(N, num_h),
            in_specs=[in_spec, in_spec, in_spec, in_spec],
            out_specs=out_spec,
        ),
        compiler_params=pltpu.CompilerParams(
            dimension_semantics=("parallel", "arbitrary"),
            vmem_limit_bytes=32 * 1024 * 1024),
    )(image_vis, generate_img, image_ir, mask_vi)

    total = jnp.sum(partials)  # tiny final reduce in the wrapper
    return jnp.asarray(loss_weight, jnp.float32) * total / jnp.float32(K)


if __name__ == "__main__":
    key = jax.random.PRNGKey(0)
    k1, k2, k3, k4 = jax.random.split(key, 4)
    N, H, W = 2, 16, 16
    image_vis = jax.random.uniform(k1, (N, 3, H, W), dtype=jnp.float32)
    image_ir = jax.random.uniform(k2, (N, 1, H, W), dtype=jnp.float32)
    generate_img = jax.random.uniform(k3, (N, 1, H, W), dtype=jnp.float32)
    mask_vi = jax.random.bernoulli(k4, 0.5, (N, 1, H, W)).astype(jnp.float32)

    loss = mask_fusion_l1_loss(image_vis, image_ir, generate_img, mask_vi,
                               loss_weight=1.0)
    loss = jax.block_until_ready(loss)

    # Pure-JAX reference of the PyTorch forward.
    image_y = image_vis[:, :1]
    gen_y = generate_img[:, :1]
    mask_ir = jnp.where(mask_vi == 1.0, 0.0, 1.0)
    ref = (jnp.mean(jnp.abs(mask_vi * image_y - gen_y))
           + jnp.mean(jnp.abs(gen_y - mask_ir * image_ir)))
    assert jnp.allclose(loss, ref, rtol=1e-5, atol=1e-6), (loss, ref)

    print("KERNEL_OK")
</pallas_src>

<mosaic_0001>
module attributes {stable_mosaic.version = 11 : i64} {
  func.func @kernel(%arg0: i32, %arg1: i32, %arg2: memref<1x1x16x16xf32, #tpu.memory_space<vmem>>, %arg3: memref<1x1x16x16xf32, #tpu.memory_space<vmem>>, %arg4: memref<1x1x16x16xf32, #tpu.memory_space<vmem>>, %arg5: memref<1x1x16x16xf32, #tpu.memory_space<vmem>>, %arg6: memref<1x8x16xf32, #tpu.memory_space<vmem>>) attributes {dimension_semantics = [#tpu.dimension_semantics<parallel>, #tpu.dimension_semantics<arbitrary>], iteration_bounds = array<i64: 2, 1>, scalar_prefetch = 0 : i64, scratch_operands = 0 : i64, tpu.core_type = #tpu.core_type<tc>, window_params = [{transform_indices = @transform_0, window_bounds = array<i64: 1, 1, 16, 16>}, {transform_indices = @transform_1, window_bounds = array<i64: 1, 1, 16, 16>}, {transform_indices = @transform_2, window_bounds = array<i64: 1, 1, 16, 16>}, {transform_indices = @transform_3, window_bounds = array<i64: 1, 1, 16, 16>}, {transform_indices = @transform_4, window_bounds = array<i64: 1, 8, 16>}]} {
    %c0_i32 = arith.constant 0 : i32
    %0 = arith.cmpi eq, %arg1, %c0_i32 : i32
    %1 = arith.extui %0 : i1 to i32
    %c0_i32_0 = arith.constant 0 : i32
    %2 = arith.cmpi ne, %1, %c0_i32_0 : i32
    scf.if %2 {
      %cst_24 = arith.constant 0.000000e+00 : f32
      %29 = vector.broadcast %cst_24 : f32 to vector<8x16xf32>
      %c0_25 = arith.constant 0 : index
      %c0_26 = arith.constant 0 : index
      %c0_27 = arith.constant 0 : index
      %30 = vector.load %arg6[%c0_25, %c0_26, %c0_27] : memref<1x8x16xf32, #tpu.memory_space<vmem>>, vector<1x8x16xf32>
      %31 = vector.shape_cast %30 : vector<1x8x16xf32> to vector<8x16xf32>
      %32 = vector.shape_cast %29 : vector<8x16xf32> to vector<1x8x16xf32>
      tpu.vector_store %arg6[%c0_25, %c0_26, %c0_27], %32 {strides = array<i32>} : memref<1x8x16xf32, #tpu.memory_space<vmem>>, vector<1x8x16xf32>,
    } else {
    }
    %c0 = arith.constant 0 : index
    %c0_1 = arith.constant 0 : index
    %c0_2 = arith.constant 0 : index
    %c0_3 = arith.constant 0 : index
    %3 = vector.load %arg2[%c0, %c0_1, %c0_2, %c0_3] : memref<1x1x16x16xf32, #tpu.memory_space<vmem>>, vector<1x1x16x16xf32>
    %4 = vector.shape_cast %3 : vector<1x1x16x16xf32> to vector<16x16xf32>
    %c0_4 = arith.constant 0 : index
    %c0_5 = arith.constant 0 : index
    %c0_6 = arith.constant 0 : index
    %c0_7 = arith.constant 0 : index
    %5 = vector.load %arg3[%c0_4, %c0_5, %c0_6, %c0_7] : memref<1x1x16x16xf32, #tpu.memory_space<vmem>>, vector<1x1x16x16xf32>
    %6 = vector.shape_cast %5 : vector<1x1x16x16xf32> to vector<16x16xf32>
    %c0_8 = arith.constant 0 : index
    %c0_9 = arith.constant 0 : index
    %c0_10 = arith.constant 0 : index
    %c0_11 = arith.constant 0 : index
    %7 = vector.load %arg4[%c0_8, %c0_9, %c0_10, %c0_11] : memref<1x1x16x16xf32, #tpu.memory_space<vmem>>, vector<1x1x16x16xf32>
    %8 = vector.shape_cast %7 : vector<1x1x16x16xf32> to vector<16x16xf32>
    %c0_12 = arith.constant 0 : index
    %c0_13 = arith.constant 0 : index
    %c0_14 = arith.constant 0 : index
    %c0_15 = arith.constant 0 : index
    %9 = vector.load %arg5[%c0_12, %c0_13, %c0_14, %c0_15] : memref<1x1x16x16xf32, #tpu.memory_space<vmem>>, vector<1x1x16x16xf32>
    %10 = vector.shape_cast %9 : vector<1x1x16x16xf32> to vector<16x16xf32>
    %11 = arith.mulf %10, %4 : vector<16x16xf32>
    %12 = arith.subf %11, %6 : vector<16x16xf32>
    %13 = math.absf %12 : vector<16x16xf32>
    %cst = arith.constant 1.000000e+00 : f32
    %14 = vector.broadcast %cst : f32 to vector<16x16xf32>
    %15 = arith.cmpf oeq, %10, %14 : vector<16x16xf32>
    %cst_16 = arith.constant 0.000000e+00 : f32
    %16 = vector.broadcast %cst_16 : f32 to vector<16x16xf32>
    %17 = arith.select %15, %16, %8 : vector<16x16xi1>, vector<16x16xf32>
    %18 = arith.subf %6, %17 : vector<16x16xf32>
    %19 = math.absf %18 : vector<16x16xf32>
    %20 = arith.addf %13, %19 : vector<16x16xf32>
    %c0_17 = arith.constant 0 : index
    %c0_18 = arith.constant 0 : index
    %c0_19 = arith.constant 0 : index
    %21 = vector.load %arg6[%c0_17, %c0_18, %c0_19] : memref<1x8x16xf32, #tpu.memory_space<vmem>>, vector<1x8x16xf32>
    %22 = vector.shape_cast %21 : vector<1x8x16xf32> to vector<8x16xf32>
    %23 = vector.shape_cast %20 : vector<16x16xf32> to vector<2x8x16xf32>
    %cst_20 = arith.constant dense<0.000000e+00> : vector<8x16xf32>
    %24 = vector.multi_reduction <add>, %23, %cst_20 [0] : vector<2x8x16xf32> to vector<8x16xf32>
    %25 = arith.addf %22, %24 : vector<8x16xf32>
    %c0_21 = arith.constant 0 : index
    %c0_22 = arith.constant 0 : index
    %c0_23 = arith.constant 0 : index
    %26 = vector.load %arg6[%c0_21, %c0_22, %c0_23] : memref<1x8x16xf32, #tpu.memory_space<vmem>>, vector<1x8x16xf32>
    %27 = vector.shape_cast %26 : vector<1x8x16xf32> to vector<8x16xf32>
    %28 = vector.shape_cast %25 : vector<8x16xf32> to vector<1x8x16xf32>
    tpu.vector_store %arg6[%c0_21, %c0_22, %c0_23], %28 {strides = array<i32>} : memref<1x8x16xf32, #tpu.memory_space<vmem>>, vector<1x8x16xf32>,
    return
  }
  func.func @transform_0(%arg0: i32, %arg1: i32) -> (i32, i32, i32, i32) {
    %c0_i32 = arith.constant 0 : i32
    %c0_i32_0 = arith.constant 0 : i32
    %c0_i32_1 = arith.constant 0 : i32
    return %arg0, %c0_i32, %arg1, %c0_i32_0 : i32, i32, i32, i32
  }
  func.func @transform_1(%arg0: i32, %arg1: i32) -> (i32, i32, i32, i32) {
    %c0_i32 = arith.constant 0 : i32
    %c0_i32_0 = arith.constant 0 : i32
    %c0_i32_1 = arith.constant 0 : i32
    return %arg0, %c0_i32, %arg1, %c0_i32_0 : i32, i32, i32, i32
  }
  func.func @transform_2(%arg0: i32, %arg1: i32) -> (i32, i32, i32, i32) {
    %c0_i32 = arith.constant 0 : i32
    %c0_i32_0 = arith.constant 0 : i32
    %c0_i32_1 = arith.constant 0 : i32
    return %arg0, %c0_i32, %arg1, %c0_i32_0 : i32, i32, i32, i32
  }
  func.func @transform_3(%arg0: i32, %arg1: i32) -> (i32, i32, i32, i32) {
    %c0_i32 = arith.constant 0 : i32
    %c0_i32_0 = arith.constant 0 : i32
    %c0_i32_1 = arith.constant 0 : i32
    return %arg0, %c0_i32, %arg1, %c0_i32_0 : i32, i32, i32, i32
  }
  func.func @transform_4(%arg0: i32, %arg1: i32) -> (i32, i32, i32) {
    %c0_i32 = arith.constant 0 : i32
    %c0_i32_0 = arith.constant 0 : i32
    %c0_i32_1 = arith.constant 0 : i32
    return %arg0, %c0_i32, %c0_i32_0 : i32, i32, i32
  }
}

</mosaic_0001>

<llo_original>
// kernel: tpu_custom_call.1
$region0: #{tpu_custom_call.1}
  #allocation0 [shape = 'u32[]', space=smem, size = 0x4, offset = 0x4, fixed_abs, tag = 'smem constant byte address 0x4 - core index']
  #allocation1 [shape = 'u32[144,128]{1,0:T(1,128)}', space=vmem, size = 0x12000, scoped, tag = 'internal scratch']
  %s0 = inlined_call_operand.hbm [shape: f32[2,3,16,16], index: 0, kind: input, shape index: {}]
  %s1 = inlined_call_operand.hbm [shape: f32[2,1,16,16], index: 1, kind: input, shape index: {}]
  %s2 = inlined_call_operand.hbm [shape: f32[2,1,16,16], index: 2, kind: input, shape index: {}]
  %s3 = inlined_call_operand.hbm [shape: f32[2,1,16,16], index: 3, kind: input, shape index: {}]
  %s4 = inlined_call_operand.hbm [shape: f32[2,8,16], index: 4, kind: output, shape index: {}]
  %s5 = sld [smem:[#allocation0]]
  $region69: #{tpu_custom_call.1} parent=0
    _
  %s7 = ssub.s32 1, %s5
  %s8 = scalar_select 0, %s7, %s5
  $region1: #{tpu_custom_call.1} parent=0
    #allocation2 [shape = 'u8[16384]{0}', space=vmem, size = 0x4000, scoped, tag = 'input window, operand 0']
    #allocation3 [shape = 's32[2]{0}', space=sflag, size = 0x8, scoped, tag = 'scoped memory for tpu_custom_call.1']
    #allocation4 [shape = 's32[2]{0}', space=sflag, size = 0x8, scoped, tag = 'scoped memory for tpu_custom_call.1']
    #allocation5 [shape = 'u8[16384]{0}', space=vmem, size = 0x4000, scoped, tag = 'input window, operand 1']
    #allocation6 [shape = 's32[2]{0}', space=sflag, size = 0x8, scoped, tag = 'scoped memory for tpu_custom_call.1']
    #allocation7 [shape = 'u8[16384]{0}', space=vmem, size = 0x4000, scoped, tag = 'input window, operand 2']
    #allocation8 [shape = 'u8[16384]{0}', space=vmem, size = 0x4000, scoped, tag = 'input window, operand 3']
    #allocation9 [shape = 's32[2]{0}', space=sflag, size = 0x8, scoped, tag = 'scoped memory for tpu_custom_call.1']
    #allocation10 [shape = 'u8[8192]{0}', space=vmem, size = 0x2000, scoped, tag = 'output window, operand 0']
    %9 = vsyncpa [#allocation3], 0
    %s10 = scalar_lea.sflag [#allocation3], 1
    %11 = vsyncpa %s10, 0
    %12 = vsyncpa [#allocation6], 0
    %s13 = scalar_lea.sflag [#allocation6], 1
    %14 = vsyncpa %s13, 0
    %15 = vsyncpa [#allocation9], 0
    %s16 = scalar_lea.sflag [#allocation9], 1
    %17 = vsyncpa %s16, 0
    %18 = vsyncpa [#allocation4], 0
    %s19 = scalar_lea.sflag [#allocation4], 1
    %20 = vsyncpa %s19, 0
    loop: start=0, step=1, limit=4
    $region2: #{tpu_custom_call.1} parent=1 // loop_pre_header
      _
    $region3: #{tpu_custom_call.1} parent=1 // loop_header
      %s22 = sphi 0, %s26
      %p23 = scmp.ge.s32.totalorder %s22, 4
      %s29 = sphi 0, %s41
      %s30 = sphi 0, %s37
      %s31 = sphi 0, %s29
      %s32 = sphi 0, %s30
      %s33 = sphi 0, %s31
      %s34 = sphi 0, %s32
      %s46 = sphi 0, %s48
      %s49 = sphi 0, %s46
      %s50 = sphi 0, %s49
      %s66 = sphi 0, %s50
      %s74 = sphi 0, %s76
      %s77 = sphi 0, %s74
      %s78 = sphi 0, %s77
      %s94 = sphi 0, %s78
      %s102 = sphi 0, %s104
      %s105 = sphi 0, %s102
      %s106 = sphi 0, %s105
      %s122 = sphi 0, %s106
      %s130 = sphi 0, %s132
      %s133 = sphi 0, %s130
      %s134 = sphi 0, %s133
      %s150 = sphi 0, %s134
      %s156 = sphi 0, %s158
      %s159 = sphi 0, %s156
      %s160 = sphi 0, %s159
      %s176 = sphi 0, %s160
    $region4: #{tpu_custom_call.1} parent=1 // loop_header_branch
      %25 = sbr.rel (%p23) target = $region8
    $region5: #{tpu_custom_call.1} parent=1 // loop_body
      %s27 = ssub.s32 %s22, 1
      %s28 = ssub.s32 %s22, 2
      %s35 = sadd.s32 1, %s30
      %p36 = scmp.ge.s32.totalorder %s35, 1
      %s37 = scalar_select %p36, 0, %s35
      %s38 = sadd.s32 1, %s29
      %s39 = scalar_select %p36, %s38, %s29
      %p40 = scmp.ge.s32.totalorder %s39, 2
      %s41 = scalar_select %p40, 0, %s39
      %s42 = ssub.s32 %s29, %s41
      %s43 = ssub.s32 %s30, %s37
      %s44 = sor.u32 %s42, %s43
      %p45 = scmp.eq.s32.totalorder %s44, 0
      %s47 = sadd.s32 %s46, 1
      %s48 = scalar_select %p45, %s46, %s47
      %p51 = pneg %p45
      %p52 = scmp.eq.s32.totalorder %s22, 1
      %p53 = por %p51, %p52
      %p54 = scmp.ne.s32.totalorder %s46, %s49
      %p55 = scmp.eq.s32.totalorder %s22, 0
      %p56 = por %p54, %p55
      %p57 = scmp.ne.s32.totalorder %s46, %s49
      %p58 = scmp.eq.s32.totalorder %s27, 1
      %p59 = por %p57, %p58
      %p60 = scmp.ne.s32.totalorder %s49, %s50
      %p61 = scmp.eq.s32.totalorder %s27, 0
      %p62 = por %p60, %p61
      %p63 = scmp.ne.s32.totalorder %s49, %s50
      %p64 = scmp.eq.s32.totalorder %s28, 1
      %p65 = por %p63, %p64
      %p67 = scmp.ne.s32.totalorder %s50, %s66
      %p68 = scmp.eq.s32.totalorder %s28, 0
      %p69 = por %p67, %p68
      %s70 = ssub.s32 %s29, %s41
      %s71 = ssub.s32 %s30, %s37
      %s72 = sor.u32 %s70, %s71
      %p73 = scmp.eq.s32.totalorder %s72, 0
      %s75 = sadd.s32 %s74, 1
      %s76 = scalar_select %p73, %s74, %s75
      %p79 = pneg %p73
      %p80 = scmp.eq.s32.totalorder %s22, 1
      %p81 = por %p79, %p80
      %p82 = scmp.ne.s32.totalorder %s74, %s77
      %p83 = scmp.eq.s32.totalorder %s22, 0
      %p84 = por %p82, %p83
      %p85 = scmp.ne.s32.totalorder %s74, %s77
      %p86 = scmp.eq.s32.totalorder %s27, 1
      %p87 = por %p85, %p86
      %p88 = scmp.ne.s32.totalorder %s77, %s78
      %p89 = scmp.eq.s32.totalorder %s27, 0
      %p90 = por %p88, %p89
      %p91 = scmp.ne.s32.totalorder %s77, %s78
      %p92 = scmp.eq.s32.totalorder %s28, 1
      %p93 = por %p91, %p92
      %p95 = scmp.ne.s32.totalorder %s78, %s94
      %p96 = scmp.eq.s32.totalorder %s28, 0
      %p97 = por %p95, %p96
      %s98 = ssub.s32 %s29, %s41
      %s99 = ssub.s32 %s30, %s37
      %s100 = sor.u32 %s98, %s99
      %p101 = scmp.eq.s32.totalorder %s100, 0
      %s103 = sadd.s32 %s102, 1
      %s104 = scalar_select %p101, %s102, %s103
      %p107 = pneg %p101
      %p108 = scmp.eq.s32.totalorder %s22, 1
      %p109 = por %p107, %p108
      %p110 = scmp.ne.s32.totalorder %s102, %s105
      %p111 = scmp.eq.s32.totalorder %s22, 0
      %p112 = por %p110, %p111
      %p113 = scmp.ne.s32.totalorder %s102, %s105
      %p114 = scmp.eq.s32.totalorder %s27, 1
      %p115 = por %p113, %p114
      %p116 = scmp.ne.s32.totalorder %s105, %s106
      %p117 = scmp.eq.s32.totalorder %s27, 0
      %p118 = por %p116, %p117
      %p119 = scmp.ne.s32.totalorder %s105, %s106
      %p120 = scmp.eq.s32.totalorder %s28, 1
      %p121 = por %p119, %p120
      %p123 = scmp.ne.s32.totalorder %s106, %s122
      %p124 = scmp.eq.s32.totalorder %s28, 0
      %p125 = por %p123, %p124
      %s126 = ssub.s32 %s29, %s41
      %s127 = ssub.s32 %s30, %s37
      %s128 = sor.u32 %s126, %s127
      %p129 = scmp.eq.s32.totalorder %s128, 0
      %s131 = sadd.s32 %s130, 1
      %s132 = scalar_select %p129, %s130, %s131
      %p135 = pneg %p129
      %p136 = scmp.eq.s32.totalorder %s22, 1
      %p137 = por %p135, %p136
      %p138 = scmp.ne.s32.totalorder %s130, %s133
      %p139 = scmp.eq.s32.totalorder %s22, 0
      %p140 = por %p138, %p139
      %p141 = scmp.ne.s32.totalorder %s130, %s133
      %p142 = scmp.eq.s32.totalorder %s27, 1
      %p143 = por %p141, %p142
      %p144 = scmp.ne.s32.totalorder %s133, %s134
      %p145 = scmp.eq.s32.totalorder %s27, 0
      %p146 = por %p144, %p145
      %p147 = scmp.ne.s32.totalorder %s133, %s134
      %p148 = scmp.eq.s32.totalorder %s28, 1
      %p149 = por %p147, %p148
      %p151 = scmp.ne.s32.totalorder %s134, %s150
      %p152 = scmp.eq.s32.totalorder %s28, 0
      %p153 = por %p151, %p152
      %s154 = ssub.s32 %s29, %s41
      %p155 = scmp.eq.s32.totalorder %s154, 0
      %s157 = sadd.s32 %s156, 1
      %s158 = scalar_select %p155, %s156, %s157
      %p161 = pneg %p155
      %p162 = scmp.eq.s32.totalorder %s22, 1
      %p163 = por %p161, %p162
      %p164 = scmp.ne.s32.totalorder %s156, %s159
      %p165 = scmp.eq.s32.totalorder %s22, 0
      %p166 = por %p164, %p165
      %p167 = scmp.ne.s32.totalorder %s156, %s159
      %p168 = scmp.eq.s32.totalorder %s27, 1
      %p169 = por %p167, %p168
      %p170 = scmp.ne.s32.totalorder %s159, %s160
      %p171 = scmp.eq.s32.totalorder %s27, 0
      %p172 = por %p170, %p171
      %p173 = scmp.ne.s32.totalorder %s159, %s160
      %p174 = scmp.eq.s32.totalorder %s28, 1
      %p175 = por %p173, %p174
      %p177 = scmp.ne.s32.totalorder %s160, %s176
      %p178 = scmp.eq.s32.totalorder %s28, 0
      %p179 = por %p177, %p178
      %p180 = scmp.le.s32.totalorder 1, %s22
      %p181 = scmp.lt.s32.totalorder %s22, 3
      %p182 = pnand %p180, %p181
      %p183 = pneg %p182
      // Predicated region
      $region9: #{tpu_custom_call.1} parent=5 // pred_check
        _
      $region10: #{tpu_custom_call.1} parent=5 // pred_check_branch
        %185 = sbr.rel (%p182) target = $region12
      $region11: #{tpu_custom_call.1} parent=5 // pred_region
        %s186 = ssub.s32 %s22, 1
      $region12: #{tpu_custom_call.1} parent=5 // pred_fallthru
        _
      %p187 = scmp.lt.s32.totalorder %s22, 2
      // Predicated region
      $region13: #{tpu_custom_call.1} parent=5 // pred_check
        %p188 = pneg %p187
      $region14: #{tpu_custom_call.1} parent=5 // pred_check_branch
        %190 = sbr.rel (%p188) target = $region16
      $region15: #{tpu_custom_call.1} parent=5 // pred_region
        // Predicated region
        $region17: #{tpu_custom_call.1} parent=15 // pred_check
          %p191 = pneg %p56
        $region18: #{tpu_custom_call.1} parent=15 // pred_check_branch
          %193 = sbr.rel (%p191) target = $region20
        $region19: #{tpu_custom_call.1} parent=15 // pred_region
          %s194 = sand.u32 %s46, 1
          %s195 = scalar_lea.sflag [#allocation3], %s194
          %s196 = sand.u32 %s46, 1
          %s197 = smul.addr %s196, 16
          %s198 = scalar_lea.vmem [#allocation2], %s197
          %s199 = smul.u32 2, %s30
          %s201 = ssub.s32 256, 256
          %202 = vsyncadd %s195, %s201
          %s203 = smul.addr %s29, 6
          %s204 = sadd.s32 %s199, %s203
          %s205 = smul.addr %s204, 128
          %s206 = scalar_lea.hbm %s0, %s205
          %s207 = sshll.u32 %s198, 4
          %s208 = int_to_ptr.vmem [resolvable:$true] %s207
          %213 = dma.hbm_to_vmem [thread:$0]  %s206, 256, %s208, %s195, 128, 128, 8
        $region20: #{tpu_custom_call.1} parent=15 // pred_fallthru
          _
        // Predicated region
        $region21: #{tpu_custom_call.1} parent=15 // pred_check
          %p214 = pneg %p84
        $region22: #{tpu_custom_call.1} parent=15 // pred_check_branch
          %216 = sbr.rel (%p214) target = $region24
        $region23: #{tpu_custom_call.1} parent=15 // pred_region
          %s217 = sand.u32 %s22, 1
          %s218 = scalar_lea.sflag [#allocation6], %s217
          %s219 = sand.u32 %s74, 1
          %s220 = smul.addr %s219, 16
          %s221 = scalar_lea.vmem [#allocation5], %s220
          %s222 = smul.u32 2, %s30
          %s224 = ssub.s32 256, 256
          %225 = vsyncadd %s218, %s224
          %s226 = smul.addr %s29, 2
          %s227 = sadd.s32 %s222, %s226
          %s228 = smul.addr %s227, 128
          %s229 = scalar_lea.hbm %s1, %s228
          %s230 = sshll.u32 %s221, 4
          %s231 = int_to_ptr.vmem [resolvable:$true] %s230
          %236 = dma.hbm_to_vmem [thread:$0]  %s229, 256, %s231, %s218, 128, 128, 8
        $region24: #{tpu_custom_call.1} parent=15 // pred_fallthru
          _
        // Predicated region
        $region25: #{tpu_custom_call.1} parent=15 // pred_check
          %p237 = pneg %p112
        $region26: #{tpu_custom_call.1} parent=15 // pred_check_branch
          %239 = sbr.rel (%p237) target = $region28
        $region27: #{tpu_custom_call.1} parent=15 // pred_region
          %s240 = sand.u32 %s22, 1
          %s241 = scalar_lea.sflag [#allocation6], %s240
          %s242 = sand.u32 %s102, 1
          %s243 = smul.addr %s242, 16
          %s244 = scalar_lea.vmem [#allocation7], %s243
          %s245 = smul.u32 2, %s30
          %s247 = ssub.s32 256, 256
          %248 = vsyncadd %s241, %s247
          %s249 = smul.addr %s29, 2
          %s250 = sadd.s32 %s245, %s249
          %s251 = smul.addr %s250, 128
          %s252 = scalar_lea.hbm %s2, %s251
          %s253 = sshll.u32 %s244, 4
          %s254 = int_to_ptr.vmem [resolvable:$true] %s253
          %259 = dma.hbm_to_vmem [thread:$0]  %s252, 256, %s254, %s241, 128, 128, 8
        $region28: #{tpu_custom_call.1} parent=15 // pred_fallthru
          _
        // Predicated region
        $region29: #{tpu_custom_call.1} parent=15 // pred_check
          %p260 = pneg %p140
        $region30: #{tpu_custom_call.1} parent=15 // pred_check_branch
          %262 = sbr.rel (%p260) target = $region32
        $region31: #{tpu_custom_call.1} parent=15 // pred_region
          %s263 = sand.u32 %s130, 1
          %s264 = scalar_lea.sflag [#allocation9], %s263
          %s265 = sand.u32 %s130, 1
          %s266 = smul.addr %s265, 16
          %s267 = scalar_lea.vmem [#allocation8], %s266
          %s268 = smul.u32 2, %s30
          %s270 = ssub.s32 256, 256
          %271 = vsyncadd %s264, %s270
          %s272 = smul.addr %s29, 2
          %s273 = sadd.s32 %s268, %s272
          %s274 = smul.addr %s273, 128
          %s275 = scalar_lea.hbm %s3, %s274
          %s276 = sshll.u32 %s267, 4
          %s277 = int_to_ptr.vmem [resolvable:$true] %s276
          %282 = dma.hbm_to_vmem [thread:$0]  %s275, 256, %s277, %s264, 128, 128, 8
        $region32: #{tpu_custom_call.1} parent=15 // pred_fallthru
          _
      $region16: #{tpu_custom_call.1} parent=5 // pred_fallthru
        _
      %p283 = scmp.le.s32.totalorder 1, %s22
      %p284 = scmp.lt.s32.totalorder %s22, 3
      %p285 = pnand %p283, %p284
      %p286 = pneg %p285
      // Predicated region
      $region33: #{tpu_custom_call.1} parent=5 // pred_check
        _
      $region34: #{tpu_custom_call.1} parent=5 // pred_check_branch
        %288 = sbr.rel (%p285) target = $region36
      $region35: #{tpu_custom_call.1} parent=5 // pred_region
        %s289 = ssub.s32 %s22, 1
        %s290 = sand.u32 %s49, 1
        %s291 = scalar_lea.sflag [#allocation3], %s290
        %s292 = sand.u32 %s49, 1
        %s293 = smul.addr %s292, 16
        %s294 = scalar_lea.vmem [#allocation2], %s293
        // Predicated region
        $region37: #{tpu_custom_call.1} parent=35 // pred_check
          %p295 = pneg %p62
        $region38: #{tpu_custom_call.1} parent=35 // pred_check_branch
          %297 = sbr.rel (%p295) target = $region40
        $region39: #{tpu_custom_call.1} parent=35 // pred_region
          %298 = dma.done %s291, 256
        $region40: #{tpu_custom_call.1} parent=35 // pred_fallthru
          _
        %s299 = sand.u32 %s27, 1
        %s300 = scalar_lea.sflag [#allocation6], %s299
        %s301 = sand.u32 %s77, 1
        %s302 = smul.addr %s301, 16
        %s303 = scalar_lea.vmem [#allocation5], %s302
        // Predicated region
        $region41: #{tpu_custom_call.1} parent=35 // pred_check
          %p304 = pneg %p90
        $region42: #{tpu_custom_call.1} parent=35 // pred_check_branch
          %306 = sbr.rel (%p304) target = $region44
        $region43: #{tpu_custom_call.1} parent=35 // pred_region
          %307 = dma.done %s300, 256
        $region44: #{tpu_custom_call.1} parent=35 // pred_fallthru
          _
        %s308 = sand.u32 %s27, 1
        %s309 = scalar_lea.sflag [#allocation6], %s308
        %s310 = sand.u32 %s105, 1
        %s311 = smul.addr %s310, 16
        %s312 = scalar_lea.vmem [#allocation7], %s311
        // Predicated region
        $region45: #{tpu_custom_call.1} parent=35 // pred_check
          %p313 = pneg %p118
        $region46: #{tpu_custom_call.1} parent=35 // pred_check_branch
          %315 = sbr.rel (%p313) target = $region48
        $region47: #{tpu_custom_call.1} parent=35 // pred_region
          %316 = dma.done %s309, 256
        $region48: #{tpu_custom_call.1} parent=35 // pred_fallthru
          _
        %s317 = sand.u32 %s133, 1
        %s318 = scalar_lea.sflag [#allocation9], %s317
        %s319 = sand.u32 %s133, 1
        %s320 = smul.addr %s319, 16
        %s321 = scalar_lea.vmem [#allocation8], %s320
        // Predicated region
        $region49: #{tpu_custom_call.1} parent=35 // pred_check
          %p322 = pneg %p146
        $region50: #{tpu_custom_call.1} parent=35 // pred_check_branch
          %324 = sbr.rel (%p322) target = $region52
        $region51: #{tpu_custom_call.1} parent=35 // pred_region
          %325 = dma.done %s318, 256
        $region52: #{tpu_custom_call.1} parent=35 // pred_fallthru
          _
        %s326 = sand.u32 %s49, 1
        %s327 = scalar_lea.sflag [#allocation3], %s326
        %s328 = sand.u32 %s49, 1
        %s329 = smul.addr %s328, 16
        %s330 = scalar_lea.vmem [#allocation2], %s329
        %p331 = pneg %p62
        %p332 = pneg %p59
        %s333 = sand.u32 %s27, 1
        %s334 = scalar_lea.sflag [#allocation6], %s333
        %s335 = sand.u32 %s77, 1
        %s336 = smul.addr %s335, 16
        %s337 = scalar_lea.vmem [#allocation5], %s336
        %p338 = pneg %p90
        %p339 = pneg %p87
        %s340 = sand.u32 %s27, 1
        %s341 = scalar_lea.sflag [#allocation6], %s340
        %s342 = sand.u32 %s105, 1
        %s343 = smul.addr %s342, 16
        %s344 = scalar_lea.vmem [#allocation7], %s343
        %p345 = pneg %p118
        %p346 = pneg %p115
        %s347 = sand.u32 %s133, 1
        %s348 = scalar_lea.sflag [#allocation9], %s347
        %s349 = sand.u32 %s133, 1
        %s350 = smul.addr %s349, 16
        %s351 = scalar_lea.vmem [#allocation8], %s350
        %p352 = pneg %p146
        %p353 = pneg %p143
        %p354 = pneg %p172
        %p355 = pneg %p169
        %s356 = sand.u32 %s159, 1
        %s357 = scalar_lea.sflag [#allocation4], %s356
        %s358 = sand.u32 %s159, 1
        %s359 = smul.addr %s358, 8
        %s360 = scalar_lea.vmem [#allocation10], %s359
        %s361 = smul.u32 2, %s32
        %s362 = smul.u32 2, %s32
        %s363 = smul.u32 2, %s32
        %s364 = smul.u32 2, %s32
        %p365 = scmp.eq.s32.totalorder %s32, 0
        // Predicated region
        $region53: #{tpu_custom_call.1} parent=35 // pred_check
          %p366 = pneg %p365
        $region54: #{tpu_custom_call.1} parent=35 // pred_check_branch
          %368 = sbr.rel (%p366) target = $region56
        $region55: #{tpu_custom_call.1} parent=35 // pred_region
          %vm369 = vcmask 130048
          %370 = vst.msk [vmem:[%s360] sm:$0xff] %vm369, 0.0
        $region56: #{tpu_custom_call.1} parent=35 // pred_fallthru
          _
        %v371 = vld [vmem:[%s294] sm:$0xff]
        %v372 = vld [vmem:[%s294 + $0x8] sm:$0xff]
        %v373 = vld [vmem:[%s303] sm:$0xff]
        %v374 = vld [vmem:[%s303 + $0x8] sm:$0xff]
        %v375 = vld [vmem:[%s312] sm:$0xff]
        %v376 = vld [vmem:[%s312 + $0x8] sm:$0xff]
        %v377 = vld [vmem:[%s321] sm:$0xff]
        %v378 = vld [vmem:[%s321 + $0x8] sm:$0xff]
        %v379 = vmul.f32 %v377, %v371
        %v380 = vmul.f32 %v378, %v372
        %v381 = vsub.f32 %v379, %v373
        %v382 = vsub.f32 %v380, %v374
        %v383 = vand.u32 2147483647, %v381
        %v384 = vand.u32 2147483647, %v382
        %vm385 = vcmp.eq.f32.partialorder %v377, 1.0
        %vm386 = vcmp.eq.f32.partialorder %v378, 1.0
        %v387 = vsel %vm385, 0.0, %v375
        %v388 = vsel %vm386, 0.0, %v376
        %v389 = vsub.f32 %v373, %v387
        %v390 = vsub.f32 %v374, %v388
        %v391 = vand.u32 2147483647, %v389
        %v392 = vand.u32 2147483647, %v390
        %v393 = vadd.f32 %v383, %v391
        %v394 = vadd.f32 %v384, %v392
        %v395 = vld [vmem:[%s360] sm:$0xff]
        %vm396 = vcmask 130048
        %v397 = vsel %vm396, %v393, 0.0
        %v398 = vsel %vm396, %v394, 0.0
        %v399 = vadd.f32 %v397, %v398
        %v400 = vadd.f32 %v395, %v399
        %401 = vst.msk [vmem:[%s360] sm:$0xff] %vm396, %v400
        %s402 = sand.u32 %s159, 1
        %s403 = scalar_lea.sflag [#allocation4], %s402
        %s404 = sand.u32 %s159, 1
        %s405 = smul.addr %s404, 8
        %s406 = scalar_lea.vmem [#allocation10], %s405
        // Predicated region
        $region57: #{tpu_custom_call.1} parent=35 // pred_check
          %p407 = pneg %p169
        $region58: #{tpu_custom_call.1} parent=35 // pred_check_branch
          %409 = sbr.rel (%p407) target = $region60
        $region59: #{tpu_custom_call.1} parent=35 // pred_region
          %s411 = ssub.s32 128, 128
          %412 = vsyncadd %s403, %s411
          %s413 = smul.addr %s31, 128
          %s414 = scalar_lea.hbm %s4, %s413
          %s416 = sshll.u32 %s406, 4
          %s417 = int_to_ptr.vmem [resolvable:$true] %s416
          %419 = dma.vmem_to_hbm [thread:$0]  %s417, 128, %s414, %s403
        $region60: #{tpu_custom_call.1} parent=35 // pred_fallthru
          _
      $region36: #{tpu_custom_call.1} parent=5 // pred_fallthru
        _
      %p420 = scmp.le.s32.totalorder 2, %s22
      // Predicated region
      $region61: #{tpu_custom_call.1} parent=5 // pred_check
        %p421 = pneg %p420
      $region62: #{tpu_custom_call.1} parent=5 // pred_check_branch
        %423 = sbr.rel (%p421) target = $region64
      $region63: #{tpu_custom_call.1} parent=5 // pred_region
        %s424 = ssub.s32 %s22, 2
        // Predicated region
        $region65: #{tpu_custom_call.1} parent=63 // pred_check
          %p425 = pneg %p175
        $region66: #{tpu_custom_call.1} parent=63 // pred_check_branch
          %427 = sbr.rel (%p425) target = $region68
        $region67: #{tpu_custom_call.1} parent=63 // pred_region
          %s428 = sand.u32 %s160, 1
          %s429 = scalar_lea.sflag [#allocation4], %s428
          %s430 = sand.u32 %s160, 1
          %s431 = smul.addr %s430, 8
          %s432 = scalar_lea.vmem [#allocation10], %s431
          %433 = dma.done %s429, 128
        $region68: #{tpu_custom_call.1} parent=63 // pred_fallthru
          _
      $region64: #{tpu_custom_call.1} parent=5 // pred_fallthru
        _
    $region6: #{tpu_custom_call.1} parent=1 // loop_footer
      %s26 = sadd.s32 1, %s22
    $region7: #{tpu_custom_call.1} parent=1 // loop_footer_branch
      %21 = sbr.rel target = $region3
    $region8: #{tpu_custom_call.1} parent=1 // loop_exit
      _
    %434 = vsyncpa [#allocation3], 1
    %s435 = scalar_lea.sflag [#allocation3], 1
    %436 = vsyncpa %s435, 1
    %437 = vsyncpa [#allocation6], 1
    %s438 = scalar_lea.sflag [#allocation6], 1
    %439 = vsyncpa %s438, 1
    %440 = vsyncpa [#allocation9], 1
    %s441 = scalar_lea.sflag [#allocation9], 1
    %442 = vsyncpa %s441, 1
    %443 = vsyncpa [#allocation4], 1
    %s444 = scalar_lea.sflag [#allocation4], 1
    %445 = vsyncpa %s444, 1

</llo_original>
